<compile_context>
chip_gen: v7x
topology: tpu7x:2x2x1
jax: 0.10.0
libtpu: 0.0.40
codegen_flags: <defaults>
</compile_context>

<pallas_src>
import functools

import jax
import jax.numpy as jnp
import numpy as np
from jax import lax
from jax.experimental import pallas as pl
from jax.experimental.pallas import tpu as pltpu


def fused_decoder_kernel(
    # inputs ------------------------------------------------------------
    x_ref,         # (Tc, B, I) f32  chunk of decoder inputs (teacher forced)
    h0_ref,        # (B, H)  f32     initial hidden
    c0_ref,        # (B, H)  f32     initial cell
    enc_ref,       # (B, S, H) bf16  encoder outputs (VMEM-resident)
    w_attn_x_ref,  # (I, S)  bf16
    w_attn_h_ref,  # (H, S)  bf16
    b_attn_ref,    # (1, S)  f32
    w_comb_x_ref,  # (I, I)  bf16
    w_comb_a_ref,  # (H, I)  bf16
    b_comb_ref,    # (1, I)  f32
    w_ih_ref,      # (I, 4H) bf16, lane order (i | f | g | o)
    w_hh_ref,      # (H, 4H) bf16
    b_lstm_ref,    # (1, 4H) f32  (b_ih + b_hh)
    w_out_ref,     # (H, O)  bf16
    b_out_ref,     # (1, O)  f32
    # outputs -----------------------------------------------------------
    out_ref,       # (Tc, B, O) f32  per-timestep projection outputs
    h_out_ref,     # (B, H) f32      final hidden
    c_out_ref,     # (B, H) f32      final cell
    # scratch -----------------------------------------------------------
    h_scr,         # VMEM (B, H) f32     hidden carried across chunks
    c_scr,         # VMEM (B, H) f32     cell carried across chunks
    enc_f32_scr,   # VMEM (B, S, H) f32  one-time f32 copy of encoder outputs
    *, t_total, t_chunk,
):
    f32 = jnp.float32
    bf16 = jnp.bfloat16
    H = h_scr.shape[-1]
    chunk = pl.program_id(0)

    @pl.when(chunk == 0)
    def _init():
        h_scr[...] = h0_ref[...]
        c_scr[...] = c0_ref[...]
        # Hoisted one-time bf16 -> f32 conversion (portable to v5e's VPU which
        # has no bf16 arithmetic); stays resident for every step / chunk.
        enc_f32_scr[...] = enc_ref[...].astype(f32)

    def bdot(a, w_ref):
        # Cast only the tiny (B, .) activation to bf16 so the MXU runs its
        # native single-pass bf16 x bf16 -> f32 path; the resident bf16 weight
        # block is consumed untouched (no per-step weight convert).
        return jnp.dot(a.astype(bf16), w_ref[...], preferred_element_type=f32)

    def step(t, carry):
        h, c = carry
        x = x_ref[t]                                                   # (B, I)

        # --- attention: softmax(Linear(cat(x, h))); concat removed via split matmul
        logits = bdot(x, w_attn_x_ref) + bdot(h, w_attn_h_ref) + b_attn_ref[...]
        logits = logits - jnp.max(logits, axis=-1, keepdims=True)
        e = jnp.exp(logits)
        denom = jnp.sum(e, axis=-1, keepdims=True)
        inv = pl.reciprocal(denom, approx=True)        # EUP slot (otherwise idle)
        inv = inv * (2.0 - denom * inv)                # one Newton step -> f32 accuracy
        attn_w = e * inv                                               # (B, S)

        # attn_applied = bmm(attn_weights, encoder_outputs): at small S a VPU
        # broadcast-multiply + reduce over S is cheapest (no per-step cast now).
        attn_applied = jnp.sum(attn_w[:, :, None] * enc_f32_scr[...], axis=1)  # (B, H)

        # --- relu(attn_combine(cat(x, attn_applied))); concat removed via split matmul
        lstm_in = jnp.maximum(
            bdot(x, w_comb_x_ref) + bdot(attn_applied, w_comb_a_ref)
            + b_comb_ref[...], 0.0)                                    # (B, I)

        # --- single-step LSTM: two fused lane-dense (., 4H) matmuls for all gates
        gates = bdot(lstm_in, w_ih_ref) + bdot(h, w_hh_ref) + b_lstm_ref[...]  # (B, 4H)
        i_g = jax.nn.sigmoid(gates[:, 0 * H:1 * H])
        f_g = jax.nn.sigmoid(gates[:, 1 * H:2 * H])
        g_g = jnp.tanh(gates[:, 2 * H:3 * H])
        o_g = jax.nn.sigmoid(gates[:, 3 * H:4 * H])
        c_new = f_g * c + i_g * g_g
        h_new = o_g * jnp.tanh(c_new)

        # --- output projection, written to the resident VMEM output block
        # (one HBM writeback per chunk instead of per step).
        out_ref[t] = (bdot(h_new, w_out_ref) + b_out_ref[...]).astype(out_ref.dtype)
        return h_new, c_new

    t_base = chunk * t_chunk
    if t_total <= t_chunk:
        # Single chunk: static trip count; modest unroll lets the scheduler
        # overlap step t+1's x-side dots with step t's h/c dependency chain.
        n_steps = t_total
        unroll = t_total <= 16
    else:
        n_steps = jnp.minimum(t_chunk, t_total - t_base)   # ragged last chunk
        unroll = False
    h_fin, c_fin = lax.fori_loop(0, n_steps, step, (h_scr[...], c_scr[...]),
                                 unroll=unroll)

    h_scr[...] = h_fin
    c_scr[...] = c_fin
    # NOTE: h_out/c_out are constant-index output blocks: they are fully
    # re-written every chunk and Pallas only DMAs them back to HBM at grid end.
    # Do not change their index_maps without revisiting this assumption.
    h_out_ref[...] = h_fin
    c_out_ref[...] = c_fin


def fused_attention_decode(x_seq, h0, c0, encoder_outputs, params, t_chunk=64):
    """Run T decoder-with-attention steps in ONE pallas_call.

    x_seq: (T, B, I) teacher-forced inputs, h0/c0: (B, H),
    encoder_outputs: (B, S, H) (bf16 ok).
    Returns (outputs (T, B, O), h (B, H), c (B, H))."""
    T, B, I = x_seq.shape
    H = h0.shape[-1]
    S = encoder_outputs.shape[1]
    O = params["w_out"].shape[-1]
    t_chunk = min(t_chunk, T)
    num_chunks = pl.cdiv(T, t_chunk)

    c2 = lambda t: (0, 0)       # constant block index -> fetched once, VMEM-resident
    c3 = lambda t: (0, 0, 0)

    in_specs = [
        pl.BlockSpec((t_chunk, B, I), lambda t: (t, 0, 0)),   # x chunk
        pl.BlockSpec((B, H), c2),                              # h0
        pl.BlockSpec((B, H), c2),                              # c0
        pl.BlockSpec((B, S, H), c3),                           # encoder outputs
        pl.BlockSpec((I, S), c2),                              # w_attn_x
        pl.BlockSpec((H, S), c2),                              # w_attn_h
        pl.BlockSpec((1, S), c2),                              # b_attn
        pl.BlockSpec((I, I), c2),                              # w_comb_x
        pl.BlockSpec((H, I), c2),                              # w_comb_a
        pl.BlockSpec((1, I), c2),                              # b_comb
        pl.BlockSpec((I, 4 * H), c2),                          # w_ih (fused gates)
        pl.BlockSpec((H, 4 * H), c2),                          # w_hh (fused gates)
        pl.BlockSpec((1, 4 * H), c2),                          # b_lstm
        pl.BlockSpec((H, O), c2),                              # w_out
        pl.BlockSpec((1, O), c2),                              # b_out
    ]
    out_specs = (
        pl.BlockSpec((t_chunk, B, O), lambda t: (t, 0, 0)),
        pl.BlockSpec((B, H), c2),
        pl.BlockSpec((B, H), c2),
    )
    out_shape = (
        jax.ShapeDtypeStruct((T, B, O), jnp.float32),
        jax.ShapeDtypeStruct((B, H), jnp.float32),
        jax.ShapeDtypeStruct((B, H), jnp.float32),
    )

    # VMEM budget derived from actual shapes (x2 for implicit double buffering),
    # clamped to 64 MiB so the same wrapper stays within v7x's physical VMEM.
    weight_bytes = sum(int(np.prod(v.shape)) * jnp.dtype(v.dtype).itemsize
                       for v in params.values())
    stream_bytes = t_chunk * B * (I + O) * 4
    state_bytes = 4 * B * H * 4
    enc_bytes = B * S * H * jnp.dtype(encoder_outputs.dtype).itemsize
    scratch_bytes = (2 * B * H + B * S * H) * 4
    vmem_limit = int(min(max(2 * (weight_bytes + stream_bytes + state_bytes + enc_bytes)
                             + scratch_bytes + (2 << 20), 4 << 20), 64 << 20))

    kernel = functools.partial(fused_decoder_kernel, t_total=T, t_chunk=t_chunk)
    return pl.pallas_call(
        kernel,
        grid=(num_chunks,),
        in_specs=in_specs,
        out_specs=out_specs,
        out_shape=out_shape,
        scratch_shapes=[pltpu.VMEM((B, H), jnp.float32),
                        pltpu.VMEM((B, H), jnp.float32),
                        pltpu.VMEM((B, S, H), jnp.float32)],
        compiler_params=pltpu.CompilerParams(
            dimension_semantics=("arbitrary",),     # sequential h/c carry
            vmem_limit_bytes=vmem_limit,
        ),
    )(x_seq, h0, c0, encoder_outputs,
      params["w_attn_x"], params["w_attn_h"], params["b_attn"],
      params["w_comb_x"], params["w_comb_a"], params["b_comb"],
      params["w_ih"], params["w_hh"], params["b_lstm"],
      params["w_out"], params["b_out"])


def decoder_step_with_attention(inp, hidden, cell, encoder_outputs, params):
    """Module-faithful forward. inp: (1,B,I), hidden/cell: (1,B,H),
    encoder_outputs: (B,S,H) -> (output (B,O), hidden (1,B,H), cell (1,B,H))."""
    out_seq, h_new, c_new = fused_attention_decode(
        inp, hidden[0], cell[0], encoder_outputs, params)
    return out_seq[0], h_new[None], c_new[None]


def prepare_params(w_attn, b_attn, w_comb, b_comb, w_ih, w_hh, b_ih, b_hh,
                   w_out, b_out, input_dim, hidden_dim,
                   weight_dtype=jnp.bfloat16):
    """Weights given as [in_features, out_features] (transpose of PyTorch).
    Splits the concat axes (so the kernel needs no lane-axis concats), keeps
    the LSTM weights fused as (in, 4H) with lane order i|f|g|o, folds the two
    LSTM biases, and stores matrices in `weight_dtype` for the bf16 MXU path."""
    I = input_dim
    wd = weight_dtype
    f32 = jnp.float32
    del hidden_dim  # layout no longer needs it
    return {
        "w_attn_x": w_attn[:I].astype(wd),                 # (I, S)
        "w_attn_h": w_attn[I:].astype(wd),                 # (H, S)
        "b_attn":   b_attn.reshape(1, -1).astype(f32),
        "w_comb_x": w_comb[:I].astype(wd),                 # (I, I)
        "w_comb_a": w_comb[I:].astype(wd),                 # (H, I)
        "b_comb":   b_comb.reshape(1, -1).astype(f32),
        "w_ih":     w_ih.astype(wd),                       # (I, 4H)
        "w_hh":     w_hh.astype(wd),                       # (H, 4H)
        "b_lstm":   (b_ih + b_hh).reshape(1, -1).astype(f32),  # (1, 4H)
        "w_out":    w_out.astype(wd),                      # (H, O)
        "b_out":    b_out.reshape(1, -1).astype(f32),
    }


def _reference_step(x, h, c, enc, params):
    """Pure-JAX single step mirroring the PyTorch forward, with the SAME
    bf16 rounding of weights and dot-LHS activations the kernel applies."""
    f32 = jnp.float32
    bf16 = jnp.bfloat16
    H = h.shape[-1]

    def bdot(a, w):   # matches the kernel's bf16 x bf16 -> f32 MXU dots
        return jnp.dot(a.astype(bf16).astype(f32), w.astype(f32))

    logits = (bdot(x, params["w_attn_x"]) + bdot(h, params["w_attn_h"])
              + params["b_attn"])
    attn_w = jax.nn.softmax(logits, axis=-1)
    attn_applied = jnp.sum(attn_w[:, :, None] * enc.astype(f32), axis=1)
    lstm_in = jax.nn.relu(bdot(x, params["w_comb_x"])
                          + bdot(attn_applied, params["w_comb_a"])
                          + params["b_comb"])
    gates = (bdot(lstm_in, params["w_ih"]) + bdot(h, params["w_hh"])
             + params["b_lstm"])
    i_g = jax.nn.sigmoid(gates[:, 0 * H:1 * H])
    f_g = jax.nn.sigmoid(gates[:, 1 * H:2 * H])
    g_g = jnp.tanh(gates[:, 2 * H:3 * H])
    o_g = jax.nn.sigmoid(gates[:, 3 * H:4 * H])
    c_new = f_g * c + i_g * g_g
    h_new = o_g * jnp.tanh(c_new)
    out = bdot(h_new, params["w_out"]) + params["b_out"]
    return out, h_new, c_new


if __name__ == "__main__":
    input_dim, output_dim, hidden_dim, source_length = 16, 16, 32, 8
    batch, steps = 2, 8
    I, H, S, O = input_dim, hidden_dim, source_length, output_dim

    key = jax.random.PRNGKey(0)
    ks = jax.random.split(key, 16)

    def rnd(k, shape, scale=0.1):
        return (scale * jax.random.normal(k, shape)).astype(jnp.float32)

    raw = dict(
        w_attn=rnd(ks[0], (I + H, S)),
        b_attn=rnd(ks[1], (S,)),
        w_comb=rnd(ks[2], (I + H, I)),
        b_comb=rnd(ks[3], (I,)),
        w_ih=rnd(ks[4], (I, 4 * H)),
        w_hh=rnd(ks[5], (H, 4 * H)),
        b_ih=rnd(ks[6], (4 * H,)),
        b_hh=rnd(ks[7], (4 * H,)),
        w_out=rnd(ks[8], (H, O)),
        b_out=rnd(ks[9], (O,)),
    )
    params = prepare_params(**raw, input_dim=I, hidden_dim=H)

    inp = rnd(ks[10], (1, batch, I), 1.0)                  # (seq=1, B, I)
    hidden = rnd(ks[11], (1, batch, H), 1.0)               # (1, B, H)
    cell = rnd(ks[12], (1, batch, H), 1.0)                 # (1, B, H)
    enc = rnd(ks[13], (batch, S, H), 1.0).astype(jnp.bfloat16)

    # ---- single decoder step (faithful to the PyTorch module's forward) ----
    out, h1, c1 = decoder_step_with_attention(inp, hidden, cell, enc, params)
    jax.block_until_ready((out, h1, c1))

    r_out, r_h, r_c = _reference_step(inp[0], hidden[0], cell[0], enc, params)
    np.testing.assert_allclose(np.asarray(out), np.asarray(r_out), rtol=1e-4, atol=1e-4)
    np.testing.assert_allclose(np.asarray(h1[0]), np.asarray(r_h), rtol=1e-4, atol=1e-4)
    np.testing.assert_allclose(np.asarray(c1[0]), np.asarray(r_c), rtol=1e-4, atol=1e-4)

    # ---- fused multi-step decode: one pallas_call, one grid step, weights and
    # ---- encoder outputs VMEM-resident, h/c carried through the in-kernel loop ----
    x_seq = rnd(ks[14], (steps, batch, I), 1.0)
    outs, hT, cT = fused_attention_decode(x_seq, hidden[0], cell[0], enc, params)
    jax.block_until_ready((outs, hT, cT))

    rh, rc = hidden[0], cell[0]
    ref_outs = []
    for t in range(steps):
        ro, rh, rc = _reference_step(x_seq[t], rh, rc, enc, params)
        ref_outs.append(ro)
    ref_outs = jnp.stack(ref_outs, axis=0)
    np.testing.assert_allclose(np.asarray(outs), np.asarray(ref_outs), rtol=2e-4, atol=2e-4)
    np.testing.assert_allclose(np.asarray(hT), np.asarray(rh), rtol=2e-4, atol=2e-4)
    np.testing.assert_allclose(np.asarray(cT), np.asarray(rc), rtol=2e-4, atol=2e-4)

    print("KERNEL_OK")
</pallas_src>

<mosaic_0001>
module attributes {stable_mosaic.version = 11 : i64} {
  func.func @fused_decoder_kernel(%arg0: i32, %arg1: memref<1x2x16xf32, #tpu.memory_space<vmem>>, %arg2: memref<2x32xf32, #tpu.memory_space<vmem>>, %arg3: memref<2x32xf32, #tpu.memory_space<vmem>>, %arg4: memref<2x8x32xbf16, #tpu.memory_space<vmem>>, %arg5: memref<16x8xbf16, #tpu.memory_space<vmem>>, %arg6: memref<32x8xbf16, #tpu.memory_space<vmem>>, %arg7: memref<1x8xf32, #tpu.memory_space<vmem>>, %arg8: memref<16x16xbf16, #tpu.memory_space<vmem>>, %arg9: memref<32x16xbf16, #tpu.memory_space<vmem>>, %arg10: memref<1x16xf32, #tpu.memory_space<vmem>>, %arg11: memref<16x128xbf16, #tpu.memory_space<vmem>>, %arg12: memref<32x128xbf16, #tpu.memory_space<vmem>>, %arg13: memref<1x128xf32, #tpu.memory_space<vmem>>, %arg14: memref<32x16xbf16, #tpu.memory_space<vmem>>, %arg15: memref<1x16xf32, #tpu.memory_space<vmem>>, %arg16: memref<1x2x16xf32, #tpu.memory_space<vmem>>, %arg17: memref<2x32xf32, #tpu.memory_space<vmem>>, %arg18: memref<2x32xf32, #tpu.memory_space<vmem>>, %arg19: memref<2x32xf32, #tpu.memory_space<vmem>>, %arg20: memref<2x32xf32, #tpu.memory_space<vmem>>, %arg21: memref<2x8x32xf32, #tpu.memory_space<vmem>>) attributes {dimension_semantics = [#tpu.dimension_semantics<arbitrary>], iteration_bounds = array<i64: 1>, scalar_prefetch = 0 : i64, scratch_operands = 3 : i64, tpu.core_type = #tpu.core_type<tc>, window_params = [{transform_indices = @transform_0, window_bounds = array<i64: 1, 2, 16>}, {pipeline_mode = #tpu.pipeline_mode<synchronous>, transform_indices = @transform_1, window_bounds = array<i64: 2, 32>}, {pipeline_mode = #tpu.pipeline_mode<synchronous>, transform_indices = @transform_2, window_bounds = array<i64: 2, 32>}, {pipeline_mode = #tpu.pipeline_mode<synchronous>, transform_indices = @transform_3, window_bounds = array<i64: 2, 8, 32>}, {pipeline_mode = #tpu.pipeline_mode<synchronous>, transform_indices = @transform_4, window_bounds = array<i64: 16, 8>}, {pipeline_mode = #tpu.pipeline_mode<synchronous>, transform_indices = @transform_5, window_bounds = array<i64: 32, 8>}, {pipeline_mode = #tpu.pipeline_mode<synchronous>, transform_indices = @transform_6, window_bounds = array<i64: 1, 8>}, {pipeline_mode = #tpu.pipeline_mode<synchronous>, transform_indices = @transform_7, window_bounds = array<i64: 16, 16>}, {pipeline_mode = #tpu.pipeline_mode<synchronous>, transform_indices = @transform_8, window_bounds = array<i64: 32, 16>}, {pipeline_mode = #tpu.pipeline_mode<synchronous>, transform_indices = @transform_9, window_bounds = array<i64: 1, 16>}, {pipeline_mode = #tpu.pipeline_mode<synchronous>, transform_indices = @transform_10, window_bounds = array<i64: 16, 128>}, {pipeline_mode = #tpu.pipeline_mode<synchronous>, transform_indices = @transform_11, window_bounds = array<i64: 32, 128>}, {pipeline_mode = #tpu.pipeline_mode<synchronous>, transform_indices = @transform_12, window_bounds = array<i64: 1, 128>}, {pipeline_mode = #tpu.pipeline_mode<synchronous>, transform_indices = @transform_13, window_bounds = array<i64: 32, 16>}, {pipeline_mode = #tpu.pipeline_mode<synchronous>, transform_indices = @transform_14, window_bounds = array<i64: 1, 16>}, {transform_indices = @transform_15, window_bounds = array<i64: 1, 2, 16>}, {pipeline_mode = #tpu.pipeline_mode<synchronous>, transform_indices = @transform_16, window_bounds = array<i64: 2, 32>}, {pipeline_mode = #tpu.pipeline_mode<synchronous>, transform_indices = @transform_17, window_bounds = array<i64: 2, 32>}]} {
    %c0_i32 = arith.constant 0 : i32
    %0 = arith.cmpi eq, %arg0, %c0_i32 : i32
    %1 = arith.extui %0 : i1 to i32
    %c0_i32_0 = arith.constant 0 : i32
    %2 = arith.cmpi ne, %1, %c0_i32_0 : i32
    scf.if %2 {
      %c0_56 = arith.constant 0 : index
      %c0_57 = arith.constant 0 : index
      %98 = vector.load %arg2[%c0_56, %c0_57] : memref<2x32xf32, #tpu.memory_space<vmem>>, vector<2x32xf32>
      %c0_58 = arith.constant 0 : index
      %c0_59 = arith.constant 0 : index
      %99 = vector.load %arg19[%c0_58, %c0_59] : memref<2x32xf32, #tpu.memory_space<vmem>>, vector<2x32xf32>
      tpu.vector_store %arg19[%c0_58, %c0_59], %98 {strides = array<i32>} : memref<2x32xf32, #tpu.memory_space<vmem>>, vector<2x32xf32>,
      %c0_60 = arith.constant 0 : index
      %c0_61 = arith.constant 0 : index
      %100 = vector.load %arg3[%c0_60, %c0_61] : memref<2x32xf32, #tpu.memory_space<vmem>>, vector<2x32xf32>
      %c0_62 = arith.constant 0 : index
      %c0_63 = arith.constant 0 : index
      %101 = vector.load %arg20[%c0_62, %c0_63] : memref<2x32xf32, #tpu.memory_space<vmem>>, vector<2x32xf32>
      tpu.vector_store %arg20[%c0_62, %c0_63], %100 {strides = array<i32>} : memref<2x32xf32, #tpu.memory_space<vmem>>, vector<2x32xf32>,
      %c0_64 = arith.constant 0 : index
      %c0_65 = arith.constant 0 : index
      %c0_66 = arith.constant 0 : index
      %102 = vector.load %arg4[%c0_64, %c0_65, %c0_66] : memref<2x8x32xbf16, #tpu.memory_space<vmem>>, vector<2x8x32xbf16>
      %103 = arith.extf %102 : vector<2x8x32xbf16> to vector<2x8x32xf32>
      %c0_67 = arith.constant 0 : index
      %c0_68 = arith.constant 0 : index
      %c0_69 = arith.constant 0 : index
      %104 = vector.load %arg21[%c0_67, %c0_68, %c0_69] : memref<2x8x32xf32, #tpu.memory_space<vmem>>, vector<2x8x32xf32>
      tpu.vector_store %arg21[%c0_67, %c0_68, %c0_69], %103 {strides = array<i32>} : memref<2x8x32xf32, #tpu.memory_space<vmem>>, vector<2x8x32xf32>,
    } else {
    }
    %c0 = arith.constant 0 : index
    %c0_1 = arith.constant 0 : index
    %3 = vector.load %arg19[%c0, %c0_1] : memref<2x32xf32, #tpu.memory_space<vmem>>, vector<2x32xf32>
    %c0_2 = arith.constant 0 : index
    %c0_3 = arith.constant 0 : index
    %4 = vector.load %arg20[%c0_2, %c0_3] : memref<2x32xf32, #tpu.memory_space<vmem>>, vector<2x32xf32>
    %c0_i32_4 = arith.constant 0 : i32
    %5 = arith.index_cast %c0_i32_4 : i32 to index
    %c0_5 = arith.constant 0 : index
    %c0_6 = arith.constant 0 : index
    %6 = vector.load %arg1[%5, %c0_5, %c0_6] : memref<1x2x16xf32, #tpu.memory_space<vmem>>, vector<1x2x16xf32>
    %7 = vector.shape_cast %6 : vector<1x2x16xf32> to vector<2x16xf32>
    %8 = arith.truncf %7 : vector<2x16xf32> to vector<2x16xbf16>
    %c0_7 = arith.constant 0 : index
    %c0_8 = arith.constant 0 : index
    %9 = vector.load %arg5[%c0_7, %c0_8] : memref<16x8xbf16, #tpu.memory_space<vmem>>, vector<16x8xbf16>
    %cst = arith.constant dense<0.000000e+00> : vector<2x8xf32>
    %10 = tpu.matmul %8, %9, %cst {dimension_numbers = #tpu.dot_dimension_numbers<[1], [0], [0], [1], [0, 0, 1, 1], [], []>} : vector<2x16xbf16>, vector<16x8xbf16>, vector<2x8xf32> -> vector<2x8xf32>
    %11 = arith.truncf %3 : vector<2x32xf32> to vector<2x32xbf16>
    %c0_9 = arith.constant 0 : index
    %c0_10 = arith.constant 0 : index
    %12 = vector.load %arg6[%c0_9, %c0_10] : memref<32x8xbf16, #tpu.memory_space<vmem>>, vector<32x8xbf16>
    %cst_11 = arith.constant dense<0.000000e+00> : vector<2x8xf32>
    %13 = tpu.matmul %11, %12, %cst_11 {dimension_numbers = #tpu.dot_dimension_numbers<[1], [0], [0], [1], [0, 0, 1, 1], [], []>} : vector<2x32xbf16>, vector<32x8xbf16>, vector<2x8xf32> -> vector<2x8xf32>
    %14 = arith.addf %10, %13 : vector<2x8xf32>
    %c0_12 = arith.constant 0 : index
    %c0_13 = arith.constant 0 : index
    %15 = vector.load %arg7[%c0_12, %c0_13] : memref<1x8xf32, #tpu.memory_space<vmem>>, vector<1x8xf32>
    %16 = vector.broadcast %15 : vector<1x8xf32> to vector<2x8xf32>
    %17 = arith.addf %14, %16 : vector<2x8xf32>
    %cst_14 = arith.constant dense<0xFF800000> : vector<2xf32>
    %18 = vector.multi_reduction <maximumf>, %17, %cst_14 [1] : vector<2x8xf32> to vector<2xf32>
    %19 = vector.shape_cast %18 : vector<2xf32> to vector<2x1xf32>
    %20 = vector.broadcast %19 : vector<2x1xf32> to vector<2x8xf32>
    %21 = arith.subf %17, %20 : vector<2x8xf32>
    %22 = math.exp %21 : vector<2x8xf32>
    %cst_15 = arith.constant dense<0.000000e+00> : vector<2xf32>
    %23 = vector.multi_reduction <add>, %22, %cst_15 [1] : vector<2x8xf32> to vector<2xf32>
    %24 = vector.shape_cast %23 : vector<2xf32> to vector<2x1xf32>
    %25 = tpu.reciprocal %24 {approx = true} : vector<2x1xf32> -> vector<2x1xf32>
    %26 = arith.mulf %24, %25 : vector<2x1xf32>
    %cst_16 = arith.constant 2.000000e+00 : f32
    %27 = vector.broadcast %cst_16 : f32 to vector<2x1xf32>
    %28 = arith.subf %27, %26 : vector<2x1xf32>
    %29 = arith.mulf %25, %28 : vector<2x1xf32>
    %30 = vector.broadcast %29 : vector<2x1xf32> to vector<2x8xf32>
    %31 = arith.mulf %22, %30 : vector<2x8xf32>
    %32 = vector.shape_cast %31 : vector<2x8xf32> to vector<2x8x1xf32>
    %c0_17 = arith.constant 0 : index
    %c0_18 = arith.constant 0 : index
    %c0_19 = arith.constant 0 : index
    %33 = vector.load %arg21[%c0_17, %c0_18, %c0_19] : memref<2x8x32xf32, #tpu.memory_space<vmem>>, vector<2x8x32xf32>
    %34 = vector.broadcast %32 : vector<2x8x1xf32> to vector<2x8x32xf32>
    %35 = arith.mulf %34, %33 : vector<2x8x32xf32>
    %cst_20 = arith.constant dense<0.000000e+00> : vector<2x32xf32>
    %36 = vector.multi_reduction <add>, %35, %cst_20 [1] : vector<2x8x32xf32> to vector<2x32xf32>
    %37 = arith.truncf %7 : vector<2x16xf32> to vector<2x16xbf16>
    %c0_21 = arith.constant 0 : index
    %c0_22 = arith.constant 0 : index
    %38 = vector.load %arg8[%c0_21, %c0_22] : memref<16x16xbf16, #tpu.memory_space<vmem>>, vector<16x16xbf16>
    %cst_23 = arith.constant dense<0.000000e+00> : vector<2x16xf32>
    %39 = tpu.matmul %37, %38, %cst_23 {dimension_numbers = #tpu.dot_dimension_numbers<[1], [0], [0], [1], [0, 0, 1, 1], [], []>} : vector<2x16xbf16>, vector<16x16xbf16>, vector<2x16xf32> -> vector<2x16xf32>
    %40 = arith.truncf %36 : vector<2x32xf32> to vector<2x32xbf16>
    %c0_24 = arith.constant 0 : index
    %c0_25 = arith.constant 0 : index
    %41 = vector.load %arg9[%c0_24, %c0_25] : memref<32x16xbf16, #tpu.memory_space<vmem>>, vector<32x16xbf16>
    %cst_26 = arith.constant dense<0.000000e+00> : vector<2x16xf32>
    %42 = tpu.matmul %40, %41, %cst_26 {dimension_numbers = #tpu.dot_dimension_numbers<[1], [0], [0], [1], [0, 0, 1, 1], [], []>} : vector<2x32xbf16>, vector<32x16xbf16>, vector<2x16xf32> -> vector<2x16xf32>
    %43 = arith.addf %39, %42 : vector<2x16xf32>
    %c0_27 = arith.constant 0 : index
    %c0_28 = arith.constant 0 : index
    %44 = vector.load %arg10[%c0_27, %c0_28] : memref<1x16xf32, #tpu.memory_space<vmem>>, vector<1x16xf32>
    %45 = vector.broadcast %44 : vector<1x16xf32> to vector<2x16xf32>
    %46 = arith.addf %43, %45 : vector<2x16xf32>
    %cst_29 = arith.constant 0.000000e+00 : f32
    %47 = vector.broadcast %cst_29 : f32 to vector<2x16xf32>
    %48 = arith.maximumf %46, %47 : vector<2x16xf32>
    %49 = arith.truncf %48 : vector<2x16xf32> to vector<2x16xbf16>
    %c0_30 = arith.constant 0 : index
    %c0_31 = arith.constant 0 : index
    %50 = vector.load %arg11[%c0_30, %c0_31] : memref<16x128xbf16, #tpu.memory_space<vmem>>, vector<16x128xbf16>
    %cst_32 = arith.constant dense<0.000000e+00> : vector<2x128xf32>
    %51 = tpu.matmul %49, %50, %cst_32 {dimension_numbers = #tpu.dot_dimension_numbers<[1], [0], [0], [1], [0, 0, 1, 1], [], []>} : vector<2x16xbf16>, vector<16x128xbf16>, vector<2x128xf32> -> vector<2x128xf32>
    %52 = arith.truncf %3 : vector<2x32xf32> to vector<2x32xbf16>
    %c0_33 = arith.constant 0 : index
    %c0_34 = arith.constant 0 : index
    %53 = vector.load %arg12[%c0_33, %c0_34] : memref<32x128xbf16, #tpu.memory_space<vmem>>, vector<32x128xbf16>
    %cst_35 = arith.constant dense<0.000000e+00> : vector<2x128xf32>
    %54 = tpu.matmul %52, %53, %cst_35 {dimension_numbers = #tpu.dot_dimension_numbers<[1], [0], [0], [1], [0, 0, 1, 1], [], []>} : vector<2x32xbf16>, vector<32x128xbf16>, vector<2x128xf32> -> vector<2x128xf32>
    %55 = arith.addf %51, %54 : vector<2x128xf32>
    %c0_36 = arith.constant 0 : index
    %c0_37 = arith.constant 0 : index
    %56 = vector.load %arg13[%c0_36, %c0_37] : memref<1x128xf32, #tpu.memory_space<vmem>>, vector<1x128xf32>
    %57 = vector.broadcast %56 : vector<1x128xf32> to vector<2x128xf32>
    %58 = arith.addf %55, %57 : vector<2x128xf32>
    %59 = vector.extract_strided_slice %58 {offsets = [0, 0], sizes = [2, 32], strides = [1, 1]} : vector<2x128xf32> to vector<2x32xf32>
    %60 = arith.negf %59 : vector<2x32xf32>
    %61 = math.exp %60 : vector<2x32xf32>
    %cst_38 = arith.constant 1.000000e+00 : f32
    %62 = vector.broadcast %cst_38 : f32 to vector<2x32xf32>
    %63 = arith.addf %62, %61 : vector<2x32xf32>
    %64 = arith.divf %62, %63 : vector<2x32xf32>
    %65 = vector.extract_strided_slice %58 {offsets = [0, 32], sizes = [2, 32], strides = [1, 1]} : vector<2x128xf32> to vector<2x32xf32>
    %66 = arith.negf %65 : vector<2x32xf32>
    %67 = math.exp %66 : vector<2x32xf32>
    %cst_39 = arith.constant 1.000000e+00 : f32
    %68 = vector.broadcast %cst_39 : f32 to vector<2x32xf32>
    %69 = arith.addf %68, %67 : vector<2x32xf32>
    %70 = arith.divf %68, %69 : vector<2x32xf32>
    %71 = vector.extract_strided_slice %58 {offsets = [0, 64], sizes = [2, 32], strides = [1, 1]} : vector<2x128xf32> to vector<2x32xf32>
    %72 = math.tanh %71 : vector<2x32xf32>
    %73 = vector.extract_strided_slice %58 {offsets = [0, 96], sizes = [2, 32], strides = [1, 1]} : vector<2x128xf32> to vector<2x32xf32>
    %74 = arith.negf %73 : vector<2x32xf32>
    %75 = math.exp %74 : vector<2x32xf32>
    %cst_40 = arith.constant 1.000000e+00 : f32
    %76 = vector.broadcast %cst_40 : f32 to vector<2x32xf32>
    %77 = arith.addf %76, %75 : vector<2x32xf32>
    %78 = arith.divf %76, %77 : vector<2x32xf32>
    %79 = arith.mulf %70, %4 : vector<2x32xf32>
    %80 = arith.mulf %64, %72 : vector<2x32xf32>
    %81 = arith.addf %79, %80 : vector<2x32xf32>
    %82 = math.tanh %81 : vector<2x32xf32>
    %83 = arith.mulf %78, %82 : vector<2x32xf32>
    %84 = arith.truncf %83 : vector<2x32xf32> to vector<2x32xbf16>
    %c0_41 = arith.constant 0 : index
    %c0_42 = arith.constant 0 : index
    %85 = vector.load %arg14[%c0_41, %c0_42] : memref<32x16xbf16, #tpu.memory_space<vmem>>, vector<32x16xbf16>
    %cst_43 = arith.constant dense<0.000000e+00> : vector<2x16xf32>
    %86 = tpu.matmul %84, %85, %cst_43 {dimension_numbers = #tpu.dot_dimension_numbers<[1], [0], [0], [1], [0, 0, 1, 1], [], []>} : vector<2x32xbf16>, vector<32x16xbf16>, vector<2x16xf32> -> vector<2x16xf32>
    %c0_44 = arith.constant 0 : index
    %c0_45 = arith.constant 0 : index
    %87 = vector.load %arg15[%c0_44, %c0_45] : memref<1x16xf32, #tpu.memory_space<vmem>>, vector<1x16xf32>
    %88 = vector.broadcast %87 : vector<1x16xf32> to vector<2x16xf32>
    %89 = arith.addf %86, %88 : vector<2x16xf32>
    %90 = arith.index_cast %c0_i32_4 : i32 to index
    %c0_46 = arith.constant 0 : index
    %c0_47 = arith.constant 0 : index
    %91 = vector.load %arg16[%90, %c0_46, %c0_47] : memref<1x2x16xf32, #tpu.memory_space<vmem>>, vector<1x2x16xf32>
    %92 = vector.shape_cast %91 : vector<1x2x16xf32> to vector<2x16xf32>
    %93 = vector.shape_cast %89 : vector<2x16xf32> to vector<1x2x16xf32>
    tpu.vector_store %arg16[%90, %c0_46, %c0_47], %93 {strides = array<i32>} : memref<1x2x16xf32, #tpu.memory_space<vmem>>, vector<1x2x16xf32>,
    %c1_i32 = arith.constant 1 : i32
    %c0_48 = arith.constant 0 : index
    %c0_49 = arith.constant 0 : index
    %94 = vector.load %arg19[%c0_48, %c0_49] : memref<2x32xf32, #tpu.memory_space<vmem>>, vector<2x32xf32>
    tpu.vector_store %arg19[%c0_48, %c0_49], %83 {strides = array<i32>} : memref<2x32xf32, #tpu.memory_space<vmem>>, vector<2x32xf32>,
    %c0_50 = arith.constant 0 : index
    %c0_51 = arith.constant 0 : index
    %95 = vector.load %arg20[%c0_50, %c0_51] : memref<2x32xf32, #tpu.memory_space<vmem>>, vector<2x32xf32>
    tpu.vector_store %arg20[%c0_50, %c0_51], %81 {strides = array<i32>} : memref<2x32xf32, #tpu.memory_space<vmem>>, vector<2x32xf32>,
    %c0_52 = arith.constant 0 : index
    %c0_53 = arith.constant 0 : index
    %96 = vector.load %arg17[%c0_52, %c0_53] : memref<2x32xf32, #tpu.memory_space<vmem>>, vector<2x32xf32>
    tpu.vector_store %arg17[%c0_52, %c0_53], %83 {strides = array<i32>} : memref<2x32xf32, #tpu.memory_space<vmem>>, vector<2x32xf32>,
    %c0_54 = arith.constant 0 : index
    %c0_55 = arith.constant 0 : index
    %97 = vector.load %arg18[%c0_54, %c0_55] : memref<2x32xf32, #tpu.memory_space<vmem>>, vector<2x32xf32>
    tpu.vector_store %arg18[%c0_54, %c0_55], %81 {strides = array<i32>} : memref<2x32xf32, #tpu.memory_space<vmem>>, vector<2x32xf32>,
    return
  }
  func.func @transform_0(%arg0: i32) -> (i32, i32, i32) {
    %c0_i32 = arith.constant 0 : i32
    %c0_i32_0 = arith.constant 0 : i32
    %c0_i32_1 = arith.constant 0 : i32
    return %arg0, %c0_i32, %c0_i32_0 : i32, i32, i32
  }
  func.func @transform_1(%arg0: i32) -> (i32, i32) {
    %c0_i32 = arith.constant 0 : i32
    %c0_i32_0 = arith.constant 0 : i32
    %c0_i32_1 = arith.constant 0 : i32
    return %c0_i32, %c0_i32_0 : i32, i32
  }
  func.func @transform_2(%arg0: i32) -> (i32, i32) {
    %c0_i32 = arith.constant 0 : i32
    %c0_i32_0 = arith.constant 0 : i32
    %c0_i32_1 = arith.constant 0 : i32
    return %c0_i32, %c0_i32_0 : i32, i32
  }
  func.func @transform_3(%arg0: i32) -> (i32, i32, i32) {
    %c0_i32 = arith.constant 0 : i32
    %c0_i32_0 = arith.constant 0 : i32
    %c0_i32_1 = arith.constant 0 : i32
    %c0_i32_2 = arith.constant 0 : i32
    return %c0_i32, %c0_i32_0, %c0_i32_1 : i32, i32, i32
  }
  func.func @transform_4(%arg0: i32) -> (i32, i32) {
    %c0_i32 = arith.constant 0 : i32
    %c0_i32_0 = arith.constant 0 : i32
    %c0_i32_1 = arith.constant 0 : i32
    return %c0_i32, %c0_i32_0 : i32, i32
  }
  func.func @transform_5(%arg0: i32) -> (i32, i32) {
    %c0_i32 = arith.constant 0 : i32
    %c0_i32_0 = arith.constant 0 : i32
    %c0_i32_1 = arith.constant 0 : i32
    return %c0_i32, %c0_i32_0 : i32, i32
  }
  func.func @transform_6(%arg0: i32) -> (i32, i32) {
    %c0_i32 = arith.constant 0 : i32
    %c0_i32_0 = arith.constant 0 : i32
    %c0_i32_1 = arith.constant 0 : i32
    return %c0_i32, %c0_i32_0 : i32, i32
  }
  func.func @transform_7(%arg0: i32) -> (i32, i32) {
    %c0_i32 = arith.constant 0 : i32
    %c0_i32_0 = arith.constant 0 : i32
    %c0_i32_1 = arith.constant 0 : i32
    return %c0_i32, %c0_i32_0 : i32, i32
  }
  func.func @transform_8(%arg0: i32) -> (i32, i32) {
    %c0_i32 = arith.constant 0 : i32
    %c0_i32_0 = arith.constant 0 : i32
    %c0_i32_1 = arith.constant 0 : i32
    return %c0_i32, %c0_i32_0 : i32, i32
  }
  func.func @transform_9(%arg0: i32) -> (i32, i32) {
    %c0_i32 = arith.constant 0 : i32
    %c0_i32_0 = arith.constant 0 : i32
    %c0_i32_1 = arith.constant 0 : i32
    return %c0_i32, %c0_i32_0 : i32, i32
  }
  func.func @transform_10(%arg0: i32) -> (i32, i32) {
    %c0_i32 = arith.constant 0 : i32
    %c0_i32_0 = arith.constant 0 : i32
    %c0_i32_1 = arith.constant 0 : i32
    return %c0_i32, %c0_i32_0 : i32, i32
  }
  func.func @transform_11(%arg0: i32) -> (i32, i32) {
    %c0_i32 = arith.constant 0 : i32
    %c0_i32_0 = arith.constant 0 : i32
    %c0_i32_1 = arith.constant 0 : i32
    return %c0_i32, %c0_i32_0 : i32, i32
  }
  func.func @transform_12(%arg0: i32) -> (i32, i32) {
    %c0_i32 = arith.constant 0 : i32
    %c0_i32_0 = arith.constant 0 : i32
    %c0_i32_1 = arith.constant 0 : i32
    return %c0_i32, %c0_i32_0 : i32, i32
  }
  func.func @transform_13(%arg0: i32) -> (i32, i32) {
    %c0_i32 = arith.constant 0 : i32
    %c0_i32_0 = arith.constant 0 : i32
    %c0_i32_1 = arith.constant 0 : i32
    return %c0_i32, %c0_i32_0 : i32, i32
  }
  func.func @transform_14(%arg0: i32) -> (i32, i32) {
    %c0_i32 = arith.constant 0 : i32
    %c0_i32_0 = arith.constant 0 : i32
    %c0_i32_1 = arith.constant 0 : i32
    return %c0_i32, %c0_i32_0 : i32, i32
  }
  func.func @transform_15(%arg0: i32) -> (i32, i32, i32) {
    %c0_i32 = arith.constant 0 : i32
    %c0_i32_0 = arith.constant 0 : i32
    %c0_i32_1 = arith.constant 0 : i32
    return %arg0, %c0_i32, %c0_i32_0 : i32, i32, i32
  }
  func.func @transform_16(%arg0: i32) -> (i32, i32) {
    %c0_i32 = arith.constant 0 : i32
    %c0_i32_0 = arith.constant 0 : i32
    %c0_i32_1 = arith.constant 0 : i32
    return %c0_i32, %c0_i32_0 : i32, i32
  }
  func.func @transform_17(%arg0: i32) -> (i32, i32) {
    %c0_i32 = arith.constant 0 : i32
    %c0_i32_0 = arith.constant 0 : i32
    %c0_i32_1 = arith.constant 0 : i32
    return %c0_i32, %c0_i32_0 : i32, i32
  }
}

</mosaic_0001>

<llo_original>
// kernel: tpu_custom_call.1
$region0: #{tpu_custom_call.1}
  #allocation0 [shape = 'u32[]', space=smem, size = 0x4, offset = 0x4, fixed_abs, tag = 'smem constant byte address 0x4 - core index']
  #allocation1 [shape = 'u32[144,128]{1,0:T(1,128)}', space=vmem, size = 0x12000, scoped, tag = 'internal scratch']
  #allocation2 [shape = 'f32[2,32]{1,0:T(2,128)}', space=vmem, size = 0x400, scoped, tag = 'scratch operand']
  #allocation3 [shape = 'f32[2,32]{1,0:T(2,128)}', space=vmem, size = 0x400, scoped, tag = 'scratch operand']
  #allocation4 [shape = 'f32[2,8,32]{2,1,0:T(8,128)}', space=vmem, size = 0x2000, scoped, tag = 'scratch operand']
  %s0 = inlined_call_operand.vmem [shape: f32[1,2,16], index: 0, kind: input, shape index: {}]
  %s1 = inlined_call_operand.vmem [shape: f32[2,32], index: 1, kind: input, shape index: {}]
  %s2 = inlined_call_operand.vmem [shape: f32[2,32], index: 2, kind: input, shape index: {}]
  %s3 = inlined_call_operand.vmem [shape: bf16[2,8,32], index: 3, kind: input, shape index: {}]
  %s4 = inlined_call_operand.vmem [shape: bf16[16,8], index: 4, kind: input, shape index: {}]
  %s5 = inlined_call_operand.vmem [shape: bf16[32,8], index: 5, kind: input, shape index: {}]
  %s6 = inlined_call_operand.vmem [shape: f32[1,8], index: 6, kind: input, shape index: {}]
  %s7 = inlined_call_operand.vmem [shape: bf16[16,16], index: 7, kind: input, shape index: {}]
  %s8 = inlined_call_operand.vmem [shape: bf16[32,16], index: 8, kind: input, shape index: {}]
  %s9 = inlined_call_operand.vmem [shape: f32[1,16], index: 9, kind: input, shape index: {}]
  %s10 = inlined_call_operand.vmem [shape: bf16[16,128], index: 10, kind: input, shape index: {}]
  %s11 = inlined_call_operand.vmem [shape: bf16[32,128], index: 11, kind: input, shape index: {}]
  %s12 = inlined_call_operand.vmem [shape: f32[1,128], index: 12, kind: input, shape index: {}]
  %s13 = inlined_call_operand.vmem [shape: bf16[32,16], index: 13, kind: input, shape index: {}]
  %s14 = inlined_call_operand.vmem [shape: f32[1,16], index: 14, kind: input, shape index: {}]
  %s15 = inlined_call_operand.hbm [shape: f32[1,2,16], index: 15, kind: output, shape index: {0}]
  %s16 = inlined_call_operand.hbm [shape: f32[2,32], index: 16, kind: output, shape index: {1}]
  %s17 = inlined_call_operand.hbm [shape: f32[2,32], index: 17, kind: output, shape index: {2}]
  %18 = xla_tuple %s15, %s16, %s17
  %s19 = sld [smem:[#allocation0]]
  $region90: #{tpu_custom_call.1} parent=0
    _
  %s21 = ssub.s32 1, %s19
  %s22 = scalar_select 0, %s21, %s19
  $region1: #{tpu_custom_call.1} parent=0
    #allocation5 [shape = 'u8[1024]{0}', space=vmem, size = 0x400, scoped, tag = 'output window, operand 0, single buffered']
    #allocation6 [shape = 's32[1]{0}', space=sflag, size = 0x4, scoped, tag = 'scoped memory for tpu_custom_call.1']
    #allocation7 [shape = 'u8[1024]{0}', space=vmem, size = 0x400, scoped, tag = 'output window, operand 1, single buffered']
    #allocation8 [shape = 's32[1]{0}', space=sflag, size = 0x4, scoped, tag = 'scoped memory for tpu_custom_call.1']
    #allocation9 [shape = 'u8[1024]{0}', space=vmem, size = 0x400, scoped, tag = 'output window, operand 2, single buffered']
    %23 = vsyncpa [#allocation6], 0
    %24 = vsyncpa [#allocation8], 0
    // Predicated region
    $region2: #{tpu_custom_call.1} parent=1 // pred_check
      _
    $region3: #{tpu_custom_call.1} parent=1 // pred_check_branch
      %26 = sbr.rel (0) target = $region5
    $region4: #{tpu_custom_call.1} parent=1 // pred_region
      _
    $region5: #{tpu_custom_call.1} parent=1 // pred_fallthru
      _
    // Predicated region
    $region6: #{tpu_custom_call.1} parent=1 // pred_check
      _
    $region7: #{tpu_custom_call.1} parent=1 // pred_check_branch
      %28 = sbr.rel (0) target = $region9
    $region8: #{tpu_custom_call.1} parent=1 // pred_region
      _
    $region9: #{tpu_custom_call.1} parent=1 // pred_fallthru
      _
    // Predicated region
    $region10: #{tpu_custom_call.1} parent=1 // pred_check
      _
    $region11: #{tpu_custom_call.1} parent=1 // pred_check_branch
      %30 = sbr.rel (0) target = $region13
    $region12: #{tpu_custom_call.1} parent=1 // pred_region
      _
    $region13: #{tpu_custom_call.1} parent=1 // pred_fallthru
      _
    // Predicated region
    $region14: #{tpu_custom_call.1} parent=1 // pred_check
      _
    $region15: #{tpu_custom_call.1} parent=1 // pred_check_branch
      %32 = sbr.rel (0) target = $region17
    $region16: #{tpu_custom_call.1} parent=1 // pred_region
      _
    $region17: #{tpu_custom_call.1} parent=1 // pred_fallthru
      _
    // Predicated region
    $region18: #{tpu_custom_call.1} parent=1 // pred_check
      _
    $region19: #{tpu_custom_call.1} parent=1 // pred_check_branch
      %34 = sbr.rel (0) target = $region21
    $region20: #{tpu_custom_call.1} parent=1 // pred_region
      _
    $region21: #{tpu_custom_call.1} parent=1 // pred_fallthru
      _
    // Predicated region
    $region22: #{tpu_custom_call.1} parent=1 // pred_check
      _
    $region23: #{tpu_custom_call.1} parent=1 // pred_check_branch
      %36 = sbr.rel (0) target = $region25
    $region24: #{tpu_custom_call.1} parent=1 // pred_region
      _
    $region25: #{tpu_custom_call.1} parent=1 // pred_fallthru
      _
    // Predicated region
    $region26: #{tpu_custom_call.1} parent=1 // pred_check
      _
    $region27: #{tpu_custom_call.1} parent=1 // pred_check_branch
      %38 = sbr.rel (0) target = $region29
    $region28: #{tpu_custom_call.1} parent=1 // pred_region
      _
    $region29: #{tpu_custom_call.1} parent=1 // pred_fallthru
      _
    // Predicated region
    $region30: #{tpu_custom_call.1} parent=1 // pred_check
      _
    $region31: #{tpu_custom_call.1} parent=1 // pred_check_branch
      %40 = sbr.rel (0) target = $region33
    $region32: #{tpu_custom_call.1} parent=1 // pred_region
      _
    $region33: #{tpu_custom_call.1} parent=1 // pred_fallthru
      _
    // Predicated region
    $region34: #{tpu_custom_call.1} parent=1 // pred_check
      _
    $region35: #{tpu_custom_call.1} parent=1 // pred_check_branch
      %42 = sbr.rel (0) target = $region37
    $region36: #{tpu_custom_call.1} parent=1 // pred_region
      _
    $region37: #{tpu_custom_call.1} parent=1 // pred_fallthru
      _
    // Predicated region
    $region38: #{tpu_custom_call.1} parent=1 // pred_check
      _
    $region39: #{tpu_custom_call.1} parent=1 // pred_check_branch
      %44 = sbr.rel (0) target = $region41
    $region40: #{tpu_custom_call.1} parent=1 // pred_region
      _
    $region41: #{tpu_custom_call.1} parent=1 // pred_fallthru
      _
    // Predicated region
    $region42: #{tpu_custom_call.1} parent=1 // pred_check
      _
    $region43: #{tpu_custom_call.1} parent=1 // pred_check_branch
      %46 = sbr.rel (0) target = $region45
    $region44: #{tpu_custom_call.1} parent=1 // pred_region
      _
    $region45: #{tpu_custom_call.1} parent=1 // pred_fallthru
      _
    // Predicated region
    $region46: #{tpu_custom_call.1} parent=1 // pred_check
      _
    $region47: #{tpu_custom_call.1} parent=1 // pred_check_branch
      %48 = sbr.rel (0) target = $region49
    $region48: #{tpu_custom_call.1} parent=1 // pred_region
      _
    $region49: #{tpu_custom_call.1} parent=1 // pred_fallthru
      _
    // Predicated region
    $region50: #{tpu_custom_call.1} parent=1 // pred_check
      _
    $region51: #{tpu_custom_call.1} parent=1 // pred_check_branch
      %50 = sbr.rel (0) target = $region53
    $region52: #{tpu_custom_call.1} parent=1 // pred_region
      _
    $region53: #{tpu_custom_call.1} parent=1 // pred_fallthru
      _
    // Predicated region
    $region54: #{tpu_custom_call.1} parent=1 // pred_check
      _
    $region55: #{tpu_custom_call.1} parent=1 // pred_check_branch
      %52 = sbr.rel (0) target = $region57
    $region56: #{tpu_custom_call.1} parent=1 // pred_region
      _
    $region57: #{tpu_custom_call.1} parent=1 // pred_fallthru
      _
    // Predicated region
    $region58: #{tpu_custom_call.1} parent=1 // pred_check
      _
    $region59: #{tpu_custom_call.1} parent=1 // pred_check_branch
      %54 = sbr.rel (0) target = $region61
    $region60: #{tpu_custom_call.1} parent=1 // pred_region
      _
    $region61: #{tpu_custom_call.1} parent=1 // pred_fallthru
      _
    %p56 = scmp.eq.s32.totalorder 0, 0
    // Predicated region
    $region62: #{tpu_custom_call.1} parent=1 // pred_check
      %p57 = pneg %p56
    $region63: #{tpu_custom_call.1} parent=1 // pred_check_branch
      %59 = sbr.rel (%p57) target = $region65
    $region64: #{tpu_custom_call.1} parent=1 // pred_region
      %v60 = vld [vmem:[%s1] sm:$0x3]
      %vm61 = vcmask 254976
      %62 = vst.msk [vmem:[#allocation2] sm:$0x3] %vm61, %v60
      %v63 = vld [vmem:[%s2] sm:$0x3]
      %64 = vst.msk [vmem:[#allocation3] sm:$0x3] %vm61, %v63
      %v65 = vld [vmem:[%s3] sm:$0xf]
      %v66 = vld [vmem:[%s3 + $0x4] sm:$0xf]
      %v67 = vunpack.c.l.bf16 %v65
      %v68 = vunpack.c.l.bf16 %v66
      %vm69 = vcmask 261120
      %70 = vst.msk [vmem:[#allocation4] sm:$0xff] %vm69, %v67
      %71 = vst.msk [vmem:[#allocation4 + $0x8] sm:$0xff] %vm69, %v68
    $region65: #{tpu_custom_call.1} parent=1 // pred_fallthru
      _
    %v72 = vld [vmem:[#allocation2] sm:$0x3]
    %v73 = vld [vmem:[#allocation3] sm:$0x3]
    %v74 = vld [vmem:[%s0] sm:$0x3]
    %v75 = vpack.c.bf16 %v74, %v74
    %v76 = vld [vmem:[%s4] sm:$0xf]
    %v77 = vld [vmem:[%s4 + $0x4] sm:$0xf]
    %v78 = vpack.c.bf16 %v72, %v72
    %v79 = vld [vmem:[%s5] sm:$0xf]
    %v80 = vld [vmem:[%s5 + $0x4] sm:$0xf]
    %v81 = vld [vmem:[%s5 + $0x8] sm:$0xf]
    %v82 = vld [vmem:[%s5 + $0xc] sm:$0xf]
    %v87 = vunpack.c.l.b16 %v79
    %v88 = vunpack.c.l.b16 %v80
    %v89 = vunpack.c.l.b16 %v81
    %v90 = vunpack.c.l.b16 %v82
    %v91 = vpack.c.b16 %v88, %v87
    %v92 = vpack.c.b16 %v90, %v89
    %vm95 = vcmask 261120
    %v97 = vsel %vm95, %v78, 0
    %99 = vmatprep.subr.bf16.mxu0 0
    %100 = vmatpush1.bf16.msra.mxu0 %v91
    %101 = vmatprep.subr.bf16.mxu0 0
    %102 = vmatpush1.bf16.msra.mxu0 %v92
    %103 = vmatprep.subr.bf16.mxu0 0
    %104 = vmatpush1.bf16.msra.mxu0 0
    %105 = vmatprep.subr.bf16.mxu0 0
    %106 = vmatpush1.bf16.msra.mxu0 0
    %107 = vmatprep.subr.bf16.mxu0 0
    %108 = vmatpush1.bf16.msra.mxu0 0
    %109 = vmatprep.subr.bf16.mxu0 0
    %110 = vmatpush1.bf16.msra.mxu0 0
    %111 = vmatprep.subr.bf16.mxu0 0
    %112 = vmatpush1.bf16.msra.mxu0 0
    %113 = vmatprep.subr.bf16.mxu0 0
    %114 = vmatpush1.bf16.msra.mxu0 0
    %115 = vmatprep.subr.bf16.mxu0 0
    %116 = vmatpush1.bf16.msra.mxu0 0
    %117 = vmatprep.subr.bf16.mxu0 0
    %118 = vmatpush1.bf16.msra.mxu0 0
    %119 = vmatprep.subr.bf16.mxu0 0
    %120 = vmatpush1.bf16.msra.mxu0 0
    %121 = vmatprep.subr.bf16.mxu0 0
    %122 = vmatpush1.bf16.msra.mxu0 0
    %123 = vmatprep.subr.bf16.mxu0 0
    %124 = vmatpush1.bf16.msra.mxu0 0
    %125 = vmatprep.subr.bf16.mxu0 0
    %126 = vmatpush1.bf16.msra.mxu0 0
    %127 = vmatprep.subr.bf16.mxu0 0
    %128 = vmatpush1.bf16.msra.mxu0 0
    %129 = vmatprep.subr.bf16.mxu0 0
    %130 = vmatpush1.bf16.msra.mxu0 0
    %131 = vmatprep.mubr.bf16.mxu0 0
    %132 = vmatmul.mubr.bf16.gmra.mrb[0].mxu0 %v97
    %v133 = vpop.f32.mrb[0].mxu0
    %v134 = vadd.f32 0.0, %v133
    %v135 = vpop.f32.mrb[0].mxu0
    %v136 = vpop.f32.mrb[0].mxu0
    %v137 = vpop.f32.mrb[0].mxu0
    %138 = vdwg.mxu0
    %v141 = vunpack.c.l.b16 %v76
    %v142 = vunpack.c.l.b16 %v77
    %v143 = vpack.c.b16 %v142, %v141
    %vm145 = vcmask 130048
    %v147 = vsel %vm145, %v75, 0
    %149 = vmatprep.subr.bf16.mxu0 0
    %150 = vmatpush1.bf16.msra.mxu0 %v143
    %151 = vmatprep.subr.bf16.mxu0 0
    %152 = vmatpush1.bf16.msra.mxu0 0
    %153 = vmatprep.subr.bf16.mxu0 0
    %154 = vmatpush1.bf16.msra.mxu0 0
    %155 = vmatprep.subr.bf16.mxu0 0
    %156 = vmatpush1.bf16.msra.mxu0 0
    %157 = vmatprep.subr.bf16.mxu0 0
    %158 = vmatpush1.bf16.msra.mxu0 0
    %159 = vmatprep.subr.bf16.mxu0 0
    %160 = vmatpush1.bf16.msra.mxu0 0
    %161 = vmatprep.subr.bf16.mxu0 0
    %162 = vmatpush1.bf16.msra.mxu0 0
    %163 = vmatprep.subr.bf16.mxu0 0
    %164 = vmatpush1.bf16.msra.mxu0 0
    %165 = vmatprep.subr.bf16.mxu0 0
    %166 = vmatpush1.bf16.msra.mxu0 0
    %167 = vmatprep.subr.bf16.mxu0 0
    %168 = vmatpush1.bf16.msra.mxu0 0
    %169 = vmatprep.subr.bf16.mxu0 0
    %170 = vmatpush1.bf16.msra.mxu0 0
    %171 = vmatprep.subr.bf16.mxu0 0
    %172 = vmatpush1.bf16.msra.mxu0 0
    %173 = vmatprep.subr.bf16.mxu0 0
    %174 = vmatpush1.bf16.msra.mxu0 0
    %175 = vmatprep.subr.bf16.mxu0 0
    %176 = vmatpush1.bf16.msra.mxu0 0
    %177 = vmatprep.subr.bf16.mxu0 0
    %178 = vmatpush1.bf16.msra.mxu0 0
    %179 = vmatprep.subr.bf16.mxu0 0
    %180 = vmatpush1.bf16.msra.mxu0 0
    %181 = vmatprep.mubr.bf16.mxu0 0
    %182 = vmatmul.mubr.bf16.gmra.mrb[0].mxu0 %v147
    %v183 = vpop.f32.mrb[0].mxu0
    %v184 = vadd.f32 %v134, %v183
    %v185 = vpop.f32.mrb[0].mxu0
    %v186 = vpop.f32.mrb[0].mxu0
    %v187 = vpop.f32.mrb[0].mxu0
    %188 = vdwg.mxu0
    %v189 = vld [vmem:[%s6] sm:$0x1]
    %v191 = vlaneseq
    %v192 = vshrl.u32 %v191, 7
    %v193 = vsub.s32 0, %v192
    %v194 = vrot.slane %v189, %v193
    %v196 = vadd.f32 %v184, %v194
    %vm197 = vcmask 58368
    %v198 = vsel %vm197, %v196, -inf
    %199 = vmax.xlane.f32.xlu0 %v198
    %v200 = vpop.xlane.xlu0 %199
    %v201 = vsub.f32 %v196, %v200
    %v202 = vmul.f32 %v201, 1.442695
    %v203 = vpow.pop %v202
    %v204 = vsel %vm197, %v203, 0.0
    %205 = vadd.xlane.f32.xlu0 %v204
    %v206 = vpop.xlane.xlu0 %205
    %v207 = vrcp.pop %v206
    %v208 = vmul.f32 %v206, %v207
    %v209 = vsub.f32 2.0, %v208
    %v210 = vmul.f32 %v207, %v209
    %v211 = vmul.f32 %v203, %v210
    %v212 = vlaneseq
    %v213 = vshrl.u32 %v212, 7
    %v214 = vsub.s32 0, %v213
    %v215 = vrot.slane %v211, %v214
    %217 = vbcast.lane.b32.xlu0 %v215, 256
    %v218 = vpop.permute.xlu0 %217
    %v219 = vlaneseq
    %v220 = vshrl.u32 %v219, 7
    %v221 = vsub.s32 1, %v220
    %v222 = vrot.slane %v211, %v221
    %224 = vbcast.lane.b32.xlu0 %v222, 256
    %v225 = vpop.permute.xlu0 %224
    %v226 = vld [vmem:[#allocation4] sm:$0xff]
    %v227 = vld [vmem:[#allocation4 + $0x8] sm:$0xff]
    %v228 = vmul.f32 %v218, %v226
    %v229 = vmul.f32 %v225, %v227
    %v230 = vsel %vm95, %v228, 0.0
    %v231 = vrot.slane %v230, 4
    %v232 = vadd.f32 %v230, %v231
    %v233 = vrot.slane %v232, 2
    %v234 = vadd.f32 %v232, %v233
    %v235 = vrot.slane %v234, 1
    %v236 = vadd.f32 %v234, %v235
    %v237 = vsel %vm95, %v229, 0.0
    %v238 = vrot.slane %v237, 4
    %v239 = vadd.f32 %v237, %v238
    %v240 = vrot.slane %v239, 2
    %v241 = vadd.f32 %v239, %v240
    %v242 = vrot.slane %v241, 1
    %v243 = vadd.f32 %v241, %v242
    %v244 = vld [vmem:[%s7] sm:$0xf]
    %v245 = vld [vmem:[%s7 + $0x4] sm:$0xf]
    %v246 = vpack.c.bf16 %v236, %v236
    %v247 = vpack.c.bf16 %v243, %v243
    %v248 = vld [vmem:[%s8] sm:$0xf]
    %v249 = vld [vmem:[%s8 + $0x4] sm:$0xf]
    %v250 = vld [vmem:[%s8 + $0x8] sm:$0xf]
    %v251 = vld [vmem:[%s8 + $0xc] sm:$0xf]
    %v254 = vunpack.c.l.b16 %v246
    %v255 = vunpack.c.l.b16 %v247
    %vm256 = vcmask 1041409
    %v257 = vsel %vm256, %v255, %v254
    %v258 = vpack.c.b16 %v257, %v257
    %v263 = vunpack.c.l.b16 %v248
    %v264 = vunpack.c.l.b16 %v249
    %v265 = vunpack.c.l.b16 %v250
    %v266 = vunpack.c.l.b16 %v251
    %v267 = vpack.c.b16 %v264, %v263
    %v268 = vpack.c.b16 %v266, %v265
    %v272 = vsel %vm95, %v258, 0
    %274 = vmatprep.subr.bf16.mxu0 0
    %275 = vmatpush1.bf16.msra.mxu0 %v267
    %276 = vmatprep.subr.bf16.mxu0 0
    %277 = vmatpush1.bf16.msra.mxu0 %v268
    %278 = vmatprep.subr.bf16.mxu0 0
    %279 = vmatpush1.bf16.msra.mxu0 0
    %280 = vmatprep.subr.bf16.mxu0 0
    %281 = vmatpush1.bf16.msra.mxu0 0
    %282 = vmatprep.subr.bf16.mxu0 0
    %283 = vmatpush1.bf16.msra.mxu0 0
    %284 = vmatprep.subr.bf16.mxu0 0
    %285 = vmatpush1.bf16.msra.mxu0 0
    %286 = vmatprep.subr.bf16.mxu0 0
    %287 = vmatpush1.bf16.msra.mxu0 0
    %288 = vmatprep.subr.bf16.mxu0 0
    %289 = vmatpush1.bf16.msra.mxu0 0
    %290 = vmatprep.subr.bf16.mxu0 0
    %291 = vmatpush1.bf16.msra.mxu0 0
    %292 = vmatprep.subr.bf16.mxu0 0
    %293 = vmatpush1.bf16.msra.mxu0 0
    %294 = vmatprep.subr.bf16.mxu0 0
    %295 = vmatpush1.bf16.msra.mxu0 0
    %296 = vmatprep.subr.bf16.mxu0 0
    %297 = vmatpush1.bf16.msra.mxu0 0
    %298 = vmatprep.subr.bf16.mxu0 0
    %299 = vmatpush1.bf16.msra.mxu0 0
    %300 = vmatprep.subr.bf16.mxu0 0
    %301 = vmatpush1.bf16.msra.mxu0 0
    %302 = vmatprep.subr.bf16.mxu0 0
    %303 = vmatpush1.bf16.msra.mxu0 0
    %304 = vmatprep.subr.bf16.mxu0 0
    %305 = vmatpush1.bf16.msra.mxu0 0
    %306 = vmatprep.mubr.bf16.mxu0 0
    %307 = vmatmul.mubr.bf16.gmra.mrb[0].mxu0 %v272
    %v308 = vpop.f32.mrb[0].mxu0
    %v309 = vadd.f32 0.0, %v308
    %v310 = vpop.f32.mrb[0].mxu0
    %v311 = vpop.f32.mrb[0].mxu0
    %v312 = vpop.f32.mrb[0].mxu0
    %313 = vdwg.mxu0
    %v316 = vunpack.c.l.b16 %v244
    %v317 = vunpack.c.l.b16 %v245
    %v318 = vpack.c.b16 %v317, %v316
    %320 = vmatprep.subr.bf16.mxu0 0
    %321 = vmatpush1.bf16.msra.mxu0 %v318
    %322 = vmatprep.subr.bf16.mxu0 0
    %323 = vmatpush1.bf16.msra.mxu0 0
    %324 = vmatprep.subr.bf16.mxu0 0
    %325 = vmatpush1.bf16.msra.mxu0 0
    %326 = vmatprep.subr.bf16.mxu0 0
    %327 = vmatpush1.bf16.msra.mxu0 0
    %328 = vmatprep.subr.bf16.mxu0 0
    %329 = vmatpush1.bf16.msra.mxu0 0
    %330 = vmatprep.subr.bf16.mxu0 0
    %331 = vmatpush1.bf16.msra.mxu0 0
    %332 = vmatprep.subr.bf16.mxu0 0
    %333 = vmatpush1.bf16.msra.mxu0 0
    %334 = vmatprep.subr.bf16.mxu0 0
    %335 = vmatpush1.bf16.msra.mxu0 0
    %336 = vmatprep.subr.bf16.mxu0 0
    %337 = vmatpush1.bf16.msra.mxu0 0
    %338 = vmatprep.subr.bf16.mxu0 0
    %339 = vmatpush1.bf16.msra.mxu0 0
    %340 = vmatprep.subr.bf16.mxu0 0
    %341 = vmatpush1.bf16.msra.mxu0 0
    %342 = vmatprep.subr.bf16.mxu0 0
    %343 = vmatpush1.bf16.msra.mxu0 0
    %344 = vmatprep.subr.bf16.mxu0 0
    %345 = vmatpush1.bf16.msra.mxu0 0
    %346 = vmatprep.subr.bf16.mxu0 0
    %347 = vmatpush1.bf16.msra.mxu0 0
    %348 = vmatprep.subr.bf16.mxu0 0
    %349 = vmatpush1.bf16.msra.mxu0 0
    %350 = vmatprep.subr.bf16.mxu0 0
    %351 = vmatpush1.bf16.msra.mxu0 0
    %352 = vmatprep.mubr.bf16.mxu0 0
    %353 = vmatmul.mubr.bf16.gmra.mrb[0].mxu0 %v147
    %v354 = vpop.f32.mrb[0].mxu0
    %v355 = vadd.f32 %v309, %v354
    %v356 = vpop.f32.mrb[0].mxu0
    %v357 = vpop.f32.mrb[0].mxu0
    %v358 = vpop.f32.mrb[0].mxu0
    %359 = vdwg.mxu0
    %v360 = vld [vmem:[%s9] sm:$0x1]
    %v362 = vlaneseq
    %v363 = vshrl.u32 %v362, 7
    %v364 = vsub.s32 0, %v363
    %v365 = vrot.slane %v360, %v364
    %v367 = vadd.f32 %v355, %v365
    %v368 = vmax.f32 %v367, 0.0
    %v369 = vpack.c.bf16 %v368, %v368
    %v370 = vld [vmem:[%s10] sm:$0xf]
    %v371 = vld [vmem:[%s10 + $0x4] sm:$0xf]
    %v372 = vld [vmem:[%s11] sm:$0xf]
    %v373 = vld [vmem:[%s11 + $0x4] sm:$0xf]
    %v374 = vld [vmem:[%s11 + $0x8] sm:$0xf]
    %v375 = vld [vmem:[%s11 + $0xc] sm:$0xf]
    %v380 = vunpack.c.l.b16 %v372
    %v381 = vunpack.c.l.b16 %v373
    %v382 = vunpack.c.l.b16 %v374
    %v383 = vunpack.c.l.b16 %v375
    %v384 = vpack.c.b16 %v381, %v380
    %v385 = vpack.c.b16 %v383, %v382
    %388 = vmatprep.subr.bf16.mxu0 0
    %389 = vmatpush1.bf16.msra.mxu0 %v384
    %390 = vmatprep.subr.bf16.mxu0 0
    %391 = vmatpush1.bf16.msra.mxu0 %v385
    %392 = vmatprep.subr.bf16.mxu0 0
    %393 = vmatpush1.bf16.msra.mxu0 0
    %394 = vmatprep.subr.bf16.mxu0 0
    %395 = vmatpush1.bf16.msra.mxu0 0
    %396 = vmatprep.subr.bf16.mxu0 0
    %397 = vmatpush1.bf16.msra.mxu0 0
    %398 = vmatprep.subr.bf16.mxu0 0
    %399 = vmatpush1.bf16.msra.mxu0 0
    %400 = vmatprep.subr.bf16.mxu0 0
    %401 = vmatpush1.bf16.msra.mxu0 0
    %402 = vmatprep.subr.bf16.mxu0 0
    %403 = vmatpush1.bf16.msra.mxu0 0
    %404 = vmatprep.subr.bf16.mxu0 0
    %405 = vmatpush1.bf16.msra.mxu0 0
    %406 = vmatprep.subr.bf16.mxu0 0
    %407 = vmatpush1.bf16.msra.mxu0 0
    %408 = vmatprep.subr.bf16.mxu0 0
    %409 = vmatpush1.bf16.msra.mxu0 0
    %410 = vmatprep.subr.bf16.mxu0 0
    %411 = vmatpush1.bf16.msra.mxu0 0
    %412 = vmatprep.subr.bf16.mxu0 0
    %413 = vmatpush1.bf16.msra.mxu0 0
    %414 = vmatprep.subr.bf16.mxu0 0
    %415 = vmatpush1.bf16.msra.mxu0 0
    %416 = vmatprep.subr.bf16.mxu0 0
    %417 = vmatpush1.bf16.msra.mxu0 0
    %418 = vmatprep.subr.bf16.mxu0 0
    %419 = vmatpush1.bf16.msra.mxu0 0
    %420 = vmatprep.mubr.bf16.mxu0 0
    %421 = vmatmul.mubr.bf16.gmra.mrb[0].mxu0 %v97
    %v422 = vpop.f32.mrb[0].mxu0
    %v423 = vadd.f32 0.0, %v422
    %v424 = vpop.f32.mrb[0].mxu0
    %v425 = vpop.f32.mrb[0].mxu0
    %v426 = vpop.f32.mrb[0].mxu0
    %427 = vdwg.mxu0
    %v430 = vunpack.c.l.b16 %v370
    %v431 = vunpack.c.l.b16 %v371
    %v432 = vpack.c.b16 %v431, %v430
    %v435 = vsel %vm145, %v369, 0
    %437 = vmatprep.subr.bf16.mxu0 0
    %438 = vmatpush1.bf16.msra.mxu0 %v432
    %439 = vmatprep.subr.bf16.mxu0 0
    %440 = vmatpush1.bf16.msra.mxu0 0
    %441 = vmatprep.subr.bf16.mxu0 0
    %442 = vmatpush1.bf16.msra.mxu0 0
    %443 = vmatprep.subr.bf16.mxu0 0
    %444 = vmatpush1.bf16.msra.mxu0 0
    %445 = vmatprep.subr.bf16.mxu0 0
    %446 = vmatpush1.bf16.msra.mxu0 0
    %447 = vmatprep.subr.bf16.mxu0 0
    %448 = vmatpush1.bf16.msra.mxu0 0
    %449 = vmatprep.subr.bf16.mxu0 0
    %450 = vmatpush1.bf16.msra.mxu0 0
    %451 = vmatprep.subr.bf16.mxu0 0
    %452 = vmatpush1.bf16.msra.mxu0 0
    %453 = vmatprep.subr.bf16.mxu0 0
    %454 = vmatpush1.bf16.msra.mxu0 0
    %455 = vmatprep.subr.bf16.mxu0 0
    %456 = vmatpush1.bf16.msra.mxu0 0
    %457 = vmatprep.subr.bf16.mxu0 0
    %458 = vmatpush1.bf16.msra.mxu0 0
    %459 = vmatprep.subr.bf16.mxu0 0
    %460 = vmatpush1.bf16.msra.mxu0 0
    %461 = vmatprep.subr.bf16.mxu0 0
    %462 = vmatpush1.bf16.msra.mxu0 0
    %463 = vmatprep.subr.bf16.mxu0 0
    %464 = vmatpush1.bf16.msra.mxu0 0
    %465 = vmatprep.subr.bf16.mxu0 0
    %466 = vmatpush1.bf16.msra.mxu0 0
    %467 = vmatprep.subr.bf16.mxu0 0
    %468 = vmatpush1.bf16.msra.mxu0 0
    %469 = vmatprep.mubr.bf16.mxu0 0
    %470 = vmatmul.mubr.bf16.gmra.mrb[0].mxu0 %v435
    %v471 = vpop.f32.mrb[0].mxu0
    %v472 = vadd.f32 %v423, %v471
    %v473 = vpop.f32.mrb[0].mxu0
    %v474 = vpop.f32.mrb[0].mxu0
    %v475 = vpop.f32.mrb[0].mxu0
    %476 = vdwg.mxu0
    %v477 = vld [vmem:[%s12] sm:$0x1]
    %v479 = vlaneseq
    %v480 = vshrl.u32 %v479, 7
    %v481 = vsub.s32 0, %v480
    %v482 = vrot.slane %v477, %v481
    %v484 = vadd.f32 %v472, %v482
    %v485 = vxor.u32 %v484, 2147483648
    %v486 = vmul.f32 %v485, 1.442695
    %v487 = vpow.pop %v486
    %v488 = vadd.f32 %v487, 1.0
    %v489 = vrcp.pop %v488
    %v490 = vmul.f32 1.0, %v489
    %v491 = vtanh.pop %v484
    %493 = vrot.lane.b32.xlu0 %v73, 32
    %v494 = vpop.permute.xlu0 %493
    %v496 = vmul.f32 %v490, %v494
    %498 = vrot.lane.b32.xlu0 %v491, 64
    %v499 = vpop.permute.xlu0 %498
    %v501 = vmul.f32 %v490, %v499
    %503 = vrot.lane.b32.xlu0 %v501, 32
    %v504 = vpop.permute.xlu0 %503
    %v506 = vadd.f32 %v496, %v504
    %v507 = vtanh.pop %v506
    %509 = vrot.lane.b32.xlu0 %v507, 64
    %v510 = vpop.permute.xlu0 %509
    %v512 = vmul.f32 %v490, %v510
    %v513 = vpack.c.bf16 %v512, %v512
    %v514 = vld [vmem:[%s13] sm:$0xf]
    %v515 = vld [vmem:[%s13 + $0x4] sm:$0xf]
    %v516 = vld [vmem:[%s13 + $0x8] sm:$0xf]
    %v517 = vld [vmem:[%s13 + $0xc] sm:$0xf]
    %v518 = vld [vmem:[%s14] sm:$0x1]
    %v520 = vlaneseq
    %v521 = vshrl.u32 %v520, 7
    %v522 = vsub.s32 0, %v521
    %v523 = vrot.slane %v518, %v522
    %526 = vrot.lane.b32.xlu0 %v513, 32
    %v527 = vpop.permute.xlu0 %526
    %v532 = vunpack.c.l.b16 %v514
    %v533 = vunpack.c.l.b16 %v515
    %v534 = vunpack.c.l.b16 %v516
    %v535 = vunpack.c.l.b16 %v517
    %v536 = vpack.c.b16 %v533, %v532
    %v537 = vpack.c.b16 %v535, %v534
    %v541 = vsel %vm95, %v527, 0
    %543 = vmatprep.subr.bf16.mxu0 0
    %544 = vmatpush1.bf16.msra.mxu0 %v536
    %545 = vmatprep.subr.bf16.mxu0 0
    %546 = vmatpush1.bf16.msra.mxu0 %v537
    %547 = vmatprep.subr.bf16.mxu0 0
    %548 = vmatpush1.bf16.msra.mxu0 0
    %549 = vmatprep.subr.bf16.mxu0 0
    %550 = vmatpush1.bf16.msra.mxu0 0
    %551 = vmatprep.subr.bf16.mxu0 0
    %552 = vmatpush1.bf16.msra.mxu0 0
    %553 = vmatprep.subr.bf16.mxu0 0
    %554 = vmatpush1.bf16.msra.mxu0 0
    %555 = vmatprep.subr.bf16.mxu0 0
    %556 = vmatpush1.bf16.msra.mxu0 0
    %557 = vmatprep.subr.bf16.mxu0 0
    %558 = vmatpush1.bf16.msra.mxu0 0
    %559 = vmatprep.subr.bf16.mxu0 0
    %560 = vmatpush1.bf16.msra.mxu0 0
    %561 = vmatprep.subr.bf16.mxu0 0
    %562 = vmatpush1.bf16.msra.mxu0 0
    %563 = vmatprep.subr.bf16.mxu0 0
    %564 = vmatpush1.bf16.msra.mxu0 0
    %565 = vmatprep.subr.bf16.mxu0 0
    %566 = vmatpush1.bf16.msra.mxu0 0
    %567 = vmatprep.subr.bf16.mxu0 0
    %568 = vmatpush1.bf16.msra.mxu0 0
    %569 = vmatprep.subr.bf16.mxu0 0
    %570 = vmatpush1.bf16.msra.mxu0 0
    %571 = vmatprep.subr.bf16.mxu0 0
    %572 = vmatpush1.bf16.msra.mxu0 0
    %573 = vmatprep.subr.bf16.mxu0 0
    %574 = vmatpush1.bf16.msra.mxu0 0
    %575 = vmatprep.mubr.bf16.mxu0 0
    %576 = vmatmul.mubr.bf16.gmra.mrb[0].mxu0 %v541
    %v577 = vpop.f32.mrb[0].mxu0
    %v578 = vadd.f32 %v523, %v577
    %v579 = vpop.f32.mrb[0].mxu0
    %v580 = vpop.f32.mrb[0].mxu0
    %v581 = vpop.f32.mrb[0].mxu0
    %582 = vdwg.mxu0
    %vm583 = vcmask 123904
    %584 = vst.msk [vmem:[#allocation5] sm:$0x3] %vm583, %v578
    %586 = vrot.lane.b32.xlu0 %v512, 32
    %v587 = vpop.permute.xlu0 %586
    %vm589 = vcmask 254976
    %590 = vst.msk [vmem:[#allocation2] sm:$0x3] %vm589, %v587
    %592 = vrot.lane.b32.xlu0 %v506, 96
    %v593 = vpop.permute.xlu0 %592
    %595 = vst.msk [vmem:[#allocation3] sm:$0x3] %vm589, %v593
    %596 = vst.msk [vmem:[#allocation7] sm:$0x3] %vm589, %v587
    %597 = vst.msk [vmem:[#allocation9] sm:$0x3] %vm589, %v593
    // Predicated region
    $region66: #{tpu_custom_call.1} parent=1 // pred_check
      _
    $region67: #{tpu_custom_call.1} parent=1 // pred_check_branch
      %599 = sbr.rel (0) target = $region69
    $region68: #{tpu_custom_call.1} parent=1 // pred_region
      %s601 = ssub.s32 32, 32
      %602 = vsyncadd [#allocation6], %s601
      %s604 = sshll.u32 [#allocation5], 4
      %s605 = int_to_ptr.vmem [resolvable:$true] %s604
      %607 = dma.vmem_to_hbm [thread:$0]  %s605, 32, %s15, [#allocation6]
    $region69: #{tpu_custom_call.1} parent=1 // pred_fallthru
      _
    // Predicated region
    $region70: #{tpu_custom_call.1} parent=1 // pred_check
      _
    $region71: #{tpu_custom_call.1} parent=1 // pred_check_branch
      %609 = sbr.rel (0) target = $region73
    $region72: #{tpu_custom_call.1} parent=1 // pred_region
      %s611 = ssub.s32 32, 32
      %612 = vsyncadd [#allocation8], %s611
      %s614 = sshll.u32 [#allocation7], 4
      %s615 = int_to_ptr.vmem [resolvable:$true] %s614
      %617 = dma.vmem_to_hbm [thread:$0]  %s615, 32, %s16, [#allocation8]
    $region73: #{tpu_custom_call.1} parent=1 // pred_fallthru
      _
    // Predicated region
    $region74: #{tpu_custom_call.1} parent=1 // pred_check
      _
    $region75: #{tpu_custom_call.1} parent=1 // pred_check_branch
      %619 = sbr.rel (0) target = $region77
    $region76: #{tpu_custom_call.1} parent=1 // pred_region
      %s621 = ssub.s32 32, 32
      %622 = vsyncadd [#allocation8], %s621
      %s624 = sshll.u32 [#allocation9], 4
      %s625 = int_to_ptr.vmem [resolvable:$true] %s624
      %627 = dma.vmem_to_hbm [thread:$0]  %s625, 32, %s17, [#allocation8]
    $region77: #{tpu_custom_call.1} parent=1 // pred_fallthru
      _
    // Predicated region
    $region78: #{tpu_custom_call.1} parent=1 // pred_check
      _
    $region79: #{tpu_custom_call.1} parent=1 // pred_check_branch
      %629 = sbr.rel (0) target = $region81
    $region80: #{tpu_custom_call.1} parent=1 // pred_region
      %630 = dma.done [#allocation6], 32
    $region81: #{tpu_custom_call.1} parent=1 // pred_fallthru
      _
    // Predicated region
    $region82: #{tpu_custom_call.1} parent=1 // pred_check
      _
    $region83: #{tpu_custom_call.1} parent=1 // pred_check_branch
      %632 = sbr.rel (0) target = $region85
    $region84: #{tpu_custom_call.1} parent=1 // pred_region
      %633 = dma.done [#allocation8], 32
    $region85: #{tpu_custom_call.1} parent=1 // pred_fallthru
      _
    // Predicated region
    $region86: #{tpu_custom_call.1} parent=1 // pred_check
      _
    $region87: #{tpu_custom_call.1} parent=1 // pred_check_branch
      %635 = sbr.rel (0) target = $region89
    $region88: #{tpu_custom_call.1} parent=1 // pred_region
      %636 = dma.done [#allocation8], 32
    $region89: #{tpu_custom_call.1} parent=1 // pred_fallthru
      _
    %637 = vsyncpa [#allocation6], 1
    %638 = vsyncpa [#allocation8], 1

</llo_original>
